<compile_context>
chip_gen: v7x
topology: tpu7x:2x2x1
jax: 0.10.0
libtpu: 0.0.40
codegen_flags: <defaults>
</compile_context>

<pallas_src>
import jax
import jax.numpy as jnp
from jax import lax
from jax.experimental import pallas as pl
from jax.experimental.pallas import tpu as pltpu


def _round_up(x, m):
    return (x + m - 1) // m * m


def _make_nce_kernel(n_valid, n_src, n_steps, inv_tau):
    """Builds the kernel; n_valid / n_src / n_steps / inv_tau are compile-time."""

    def kernel(x_ref, w_ref, lat_ref, dc_ref, src_ref, o_ref, acc_ref):
        k = pl.program_id(0)

        # ---- init accumulator on the first K tile ----
        @pl.when(k == 0)
        def _():
            acc_ref[...] = jnp.zeros_like(acc_ref)

        # ---- streamed, K-tiled image projection (bf16 operands, f32 acc) ----
        acc_ref[...] += jnp.dot(
            x_ref[...], w_ref[...], preferred_element_type=jnp.float32
        )

        # ---- epilogue: runs once on the last K tile ----
        @pl.when(k == n_steps - 1)
        def _():
            # encode_image proxy output, L2-normalized (rsqrt -> EUP slot)
            latent_aug = acc_ref[...]
            latent_aug = latent_aug * lax.rsqrt(
                jnp.sum(latent_aug * latent_aug, axis=-1, keepdims=True)
            )

            # q = normalize(latent_aug - latent_c)
            q = latent_aug - lat_ref[...]
            q = q * lax.rsqrt(jnp.sum(q * q, axis=-1, keepdims=True))

            # k_neg = normalize(src_feat - latent_c[:1])   (computed once)
            k_neg = src_ref[...] - lat_ref[0:1, :]
            k_neg = k_neg * lax.rsqrt(
                jnp.sum(k_neg * k_neg, axis=-1, keepdims=True)
            )

            # logits
            pos = jnp.sum(q * dc_ref[...], axis=-1, keepdims=True)       # [Np,1]
            neg = lax.dot_general(                                        # [Np,Tp]
                q, k_neg,
                dimension_numbers=(((1,), (1,)), ((), ())),
                preferred_element_type=jnp.float32,
            )
            pos_l = pos * inv_tau
            neg_l = neg * inv_tau

            # mask padded text-template columns out of the negatives
            col = lax.broadcasted_iota(jnp.int32, neg_l.shape, 1)
            neg_l = jnp.where(col < n_src, neg_l, -jnp.inf)

            # cross_entropy(logits, labels=0, reduction='mean')
            m = jnp.maximum(pos_l, jnp.max(neg_l, axis=-1, keepdims=True))
            s = jnp.exp(pos_l - m) + jnp.sum(
                jnp.exp(neg_l - m), axis=-1, keepdims=True
            )
            per_row = m + jnp.log(s) - pos_l                              # [Np,1]

            # mask padded batch rows, mean over the true batch size
            row = lax.broadcasted_iota(jnp.int32, per_row.shape, 0)
            per_row = jnp.where(row < n_valid, per_row, 0.0)
            o_ref[0, 0] = jnp.sum(per_row) / n_valid

    return kernel


def nce_loss(x_aug, latent_c, delta_c, w_img, src_feat, *, block_k=2048, tau=0.1):
    """Pallas wrapper.

    x_aug: [N,C,H,W]; latent_c, delta_c: [N,D]; w_img: [C*H*W, D]; src_feat: [T,D].
    block_k: K-tile size (multiple of 128). ~2048 is v7x-safe; v5e/v6e can use
             4096-8192 for fewer grid steps.
    """
    N, C, H, W = x_aug.shape
    K = C * H * W
    D = latent_c.shape[-1]
    T = src_feat.shape[0]

    f32, bf16 = jnp.float32, jnp.bfloat16

    # Row / K padding (padded rows & columns are zero and masked / exact).
    N_pad = _round_up(max(N, 8), 8)
    T_pad = _round_up(max(T, 8), 8)
    tk = min(_round_up(block_k, 128), _round_up(K, 128))
    K_pad = _round_up(K, tk)
    n_steps = K_pad // tk

    x_flat = x_aug.reshape(N, K).astype(f32)
    x_p = jnp.zeros((N_pad, K_pad), bf16).at[:N, :K].set(x_flat.astype(bf16))
    w_p = jnp.zeros((K_pad, D), bf16).at[:K, :].set(w_img.astype(bf16))
    lat_p = jnp.zeros((N_pad, D), f32).at[:N, :].set(latent_c.astype(f32))
    dc_p = jnp.zeros((N_pad, D), f32).at[:N, :].set(delta_c.astype(f32))
    src_p = jnp.zeros((T_pad, D), f32).at[:T, :].set(src_feat.astype(f32))

    kernel = _make_nce_kernel(
        n_valid=N, n_src=T, n_steps=n_steps, inv_tau=1.0 / tau
    )

    # VMEM budget: 2 pipeline buffers of the bf16 streaming tiles + resident
    # small operands + f32 accumulator, with 2x headroom, capped v7x-safe.
    stream_bytes = 2 * 2 * (N_pad * tk + tk * D)                 # bf16, 2 bufs
    resident_bytes = 4 * D * (2 * N_pad + T_pad) * 2 + 4 * N_pad * D
    vmem_limit = int(
        min(48 * 2**20, max(8 * 2**20, 2 * (stream_bytes + resident_bytes)))
    )

    cost = pl.CostEstimate(
        flops=int(2 * N_pad * K_pad * D + 2 * N_pad * T_pad * D),
        transcendentals=int(N_pad * (T_pad + 8)),
        bytes_accessed=int(
            x_p.size * 2 + w_p.size * 2
            + (lat_p.size + dc_p.size + src_p.size) * 4 + 4
        ),
    )

    grid_spec = pltpu.PrefetchScalarGridSpec(
        num_scalar_prefetch=0,
        grid=(n_steps,),
        in_specs=[
            pl.BlockSpec((N_pad, tk), lambda k: (0, k)),   # x    (streamed over K)
            pl.BlockSpec((tk, D), lambda k: (k, 0)),       # w    (streamed over K)
            pl.BlockSpec((N_pad, D), lambda k: (0, 0)),    # latent_c  (resident)
            pl.BlockSpec((N_pad, D), lambda k: (0, 0)),    # delta_c   (resident)
            pl.BlockSpec((T_pad, D), lambda k: (0, 0)),    # src_feat  (resident)
        ],
        out_specs=pl.BlockSpec(
            (1, 1), lambda k: (0, 0), memory_space=pltpu.MemorySpace.SMEM
        ),
        scratch_shapes=[pltpu.VMEM((N_pad, D), jnp.float32)],
    )

    out = pl.pallas_call(
        kernel,
        out_shape=jax.ShapeDtypeStruct((1, 1), f32),
        grid_spec=grid_spec,
        compiler_params=pltpu.CompilerParams(
            dimension_semantics=("arbitrary",),   # K is a reduction axis
            vmem_limit_bytes=vmem_limit,
        ),
        cost_estimate=cost,
    )(x_p, w_p, lat_p, dc_p, src_p)

    # TODO(synk): on v7x the K reduction could additionally be split across the
    #             two TensorCores (core_map + cross-core combine) for ~2x BW.
    return out[0, 0]


def nce_loss_ref(x_aug, latent_c, delta_c, w_img, src_feat, tau=0.1):
    """Pure-JAX reference (same bf16-operand / f32-accumulate matmul contract)."""
    N = x_aug.shape[0]
    x_flat = x_aug.reshape(N, -1)
    latent_aug = jnp.dot(
        x_flat.astype(jnp.bfloat16),
        w_img.astype(jnp.bfloat16),
        preferred_element_type=jnp.float32,
    )
    latent_aug = latent_aug / jnp.linalg.norm(latent_aug, axis=-1, keepdims=True)
    q = latent_aug - latent_c
    q = q / jnp.linalg.norm(q, axis=-1, keepdims=True)
    k_neg = src_feat - latent_c[:1]
    k_neg = k_neg / jnp.linalg.norm(k_neg, axis=-1, keepdims=True)
    pos = jnp.sum(q * delta_c, axis=1, keepdims=True)
    neg = q @ k_neg.T
    logits = jnp.concatenate([pos, neg], axis=1) / tau
    lse = jax.nn.logsumexp(logits, axis=1)
    return jnp.mean(lse - logits[:, 0])


if __name__ == "__main__":
    # Small, deterministic example shapes.
    N, C, H, W = 2, 3, 16, 16   # batch of augmented images (NCHW)
    D = 128                     # embedding dim (CLIP would be 512)
    T = 8                       # number of text templates (imagenet_templates proxy)

    key = jax.random.PRNGKey(0)
    k_x, k_lat, k_dc, k_w, k_src = jax.random.split(key, 5)

    x_aug = jax.random.normal(k_x, (N, C, H, W), dtype=jnp.float32)
    latent_c = jax.random.normal(k_lat, (N, D), dtype=jnp.float32)
    latent_c = latent_c / jnp.linalg.norm(latent_c, axis=-1, keepdims=True)
    delta_c = jax.random.normal(k_dc, (N, D), dtype=jnp.float32)
    delta_c = delta_c / jnp.linalg.norm(delta_c, axis=-1, keepdims=True)

    # Deterministic stand-in parameters for the frozen CLIP encoders.
    w_img = jax.random.normal(k_w, (C * H * W, D), dtype=jnp.float32) * 0.02
    src_feat = jax.random.normal(k_src, (T, D), dtype=jnp.float32)
    src_feat = src_feat / jnp.linalg.norm(src_feat, axis=-1, keepdims=True)

    # Small block_k so the demo exercises the multi-step K-tiled pipeline
    # (K = 768 -> 3 grid steps). Production would use block_k=2048+.
    loss = nce_loss(x_aug, latent_c, delta_c, w_img, src_feat, block_k=256)
    jax.block_until_ready(loss)

    loss_ref = nce_loss_ref(x_aug, latent_c, delta_c, w_img, src_feat)
    assert jnp.allclose(loss, loss_ref, rtol=1e-3, atol=1e-3), (loss, loss_ref)

    print("KERNEL_OK")
</pallas_src>

<mosaic_0001>
module attributes {stable_mosaic.version = 11 : i64} {
  func.func @kernel(%arg0: i32, %arg1: memref<8x256xbf16, #tpu.memory_space<vmem>>, %arg2: memref<256x128xbf16, #tpu.memory_space<vmem>>, %arg3: memref<8x128xf32, #tpu.memory_space<vmem>>, %arg4: memref<8x128xf32, #tpu.memory_space<vmem>>, %arg5: memref<8x128xf32, #tpu.memory_space<vmem>>, %arg6: memref<1x1xf32, #tpu.memory_space<smem>>, %arg7: memref<8x128xf32, #tpu.memory_space<vmem>>) attributes {dimension_semantics = [#tpu.dimension_semantics<arbitrary>], iteration_bounds = array<i64: 3>, scalar_prefetch = 0 : i64, scratch_operands = 1 : i64, tpu.core_type = #tpu.core_type<tc>, window_params = [{transform_indices = @transform_0, window_bounds = array<i64: 8, 256>}, {transform_indices = @transform_1, window_bounds = array<i64: 256, 128>}, {pipeline_mode = #tpu.pipeline_mode<synchronous>, transform_indices = @transform_2, window_bounds = array<i64: 8, 128>}, {pipeline_mode = #tpu.pipeline_mode<synchronous>, transform_indices = @transform_3, window_bounds = array<i64: 8, 128>}, {pipeline_mode = #tpu.pipeline_mode<synchronous>, transform_indices = @transform_4, window_bounds = array<i64: 8, 128>}, {transform_indices = @transform_5, window_bounds = array<i64: 1, 1>}]} {
    %c0_i32 = arith.constant 0 : i32
    %0 = arith.cmpi eq, %arg0, %c0_i32 : i32
    %1 = arith.extui %0 : i1 to i32
    %c0_i32_0 = arith.constant 0 : i32
    %2 = arith.cmpi ne, %1, %c0_i32_0 : i32
    scf.if %2 {
      %cst_9 = arith.constant 0.000000e+00 : f32
      %12 = vector.broadcast %cst_9 : f32 to vector<8x128xf32>
      %c0_10 = arith.constant 0 : index
      %c0_11 = arith.constant 0 : index
      %13 = vector.load %arg7[%c0_10, %c0_11] : memref<8x128xf32, #tpu.memory_space<vmem>>, vector<8x128xf32>
      tpu.vector_store %arg7[%c0_10, %c0_11], %12 {strides = array<i32>} : memref<8x128xf32, #tpu.memory_space<vmem>>, vector<8x128xf32>,
    } else {
    }
    %c0 = arith.constant 0 : index
    %c0_1 = arith.constant 0 : index
    %3 = vector.load %arg7[%c0, %c0_1] : memref<8x128xf32, #tpu.memory_space<vmem>>, vector<8x128xf32>
    %c0_2 = arith.constant 0 : index
    %c0_3 = arith.constant 0 : index
    %4 = vector.load %arg1[%c0_2, %c0_3] : memref<8x256xbf16, #tpu.memory_space<vmem>>, vector<8x256xbf16>
    %c0_4 = arith.constant 0 : index
    %c0_5 = arith.constant 0 : index
    %5 = vector.load %arg2[%c0_4, %c0_5] : memref<256x128xbf16, #tpu.memory_space<vmem>>, vector<256x128xbf16>
    %cst = arith.constant dense<0.000000e+00> : vector<8x128xf32>
    %6 = tpu.matmul %4, %5, %cst {dimension_numbers = #tpu.dot_dimension_numbers<[1], [0], [0], [1], [0, 0, 1, 1], [], []>} : vector<8x256xbf16>, vector<256x128xbf16>, vector<8x128xf32> -> vector<8x128xf32>
    %7 = arith.addf %3, %6 : vector<8x128xf32>
    %c0_6 = arith.constant 0 : index
    %c0_7 = arith.constant 0 : index
    %8 = vector.load %arg7[%c0_6, %c0_7] : memref<8x128xf32, #tpu.memory_space<vmem>>, vector<8x128xf32>
    tpu.vector_store %arg7[%c0_6, %c0_7], %7 {strides = array<i32>} : memref<8x128xf32, #tpu.memory_space<vmem>>, vector<8x128xf32>,
    %c2_i32 = arith.constant 2 : i32
    %9 = arith.cmpi eq, %arg0, %c2_i32 : i32
    %10 = arith.extui %9 : i1 to i32
    %c0_i32_8 = arith.constant 0 : i32
    %11 = arith.cmpi ne, %10, %c0_i32_8 : i32
    scf.if %11 {
      %c0_9 = arith.constant 0 : index
      %c0_10 = arith.constant 0 : index
      %12 = vector.load %arg7[%c0_9, %c0_10] : memref<8x128xf32, #tpu.memory_space<vmem>>, vector<8x128xf32>
      %13 = arith.mulf %12, %12 : vector<8x128xf32>
      %cst_11 = arith.constant dense<0.000000e+00> : vector<8xf32>
      %14 = vector.multi_reduction <add>, %13, %cst_11 [1] : vector<8x128xf32> to vector<8xf32>
      %15 = vector.shape_cast %14 : vector<8xf32> to vector<8x1xf32>
      %16 = math.rsqrt %15 : vector<8x1xf32>
      %17 = vector.broadcast %16 : vector<8x1xf32> to vector<8x128xf32>
      %18 = arith.mulf %12, %17 : vector<8x128xf32>
      %c0_12 = arith.constant 0 : index
      %c0_13 = arith.constant 0 : index
      %19 = vector.load %arg3[%c0_12, %c0_13] : memref<8x128xf32, #tpu.memory_space<vmem>>, vector<8x128xf32>
      %20 = arith.subf %18, %19 : vector<8x128xf32>
      %21 = arith.mulf %20, %20 : vector<8x128xf32>
      %cst_14 = arith.constant dense<0.000000e+00> : vector<8xf32>
      %22 = vector.multi_reduction <add>, %21, %cst_14 [1] : vector<8x128xf32> to vector<8xf32>
      %23 = vector.shape_cast %22 : vector<8xf32> to vector<8x1xf32>
      %24 = math.rsqrt %23 : vector<8x1xf32>
      %25 = vector.broadcast %24 : vector<8x1xf32> to vector<8x128xf32>
      %26 = arith.mulf %20, %25 : vector<8x128xf32>
      %c0_15 = arith.constant 0 : index
      %c0_16 = arith.constant 0 : index
      %27 = vector.load %arg5[%c0_15, %c0_16] : memref<8x128xf32, #tpu.memory_space<vmem>>, vector<8x128xf32>
      %c0_17 = arith.constant 0 : index
      %c0_18 = arith.constant 0 : index
      %28 = vector.load %arg3[%c0_17, %c0_18] : memref<8x128xf32, #tpu.memory_space<vmem>>, vector<1x128xf32>
      %29 = vector.broadcast %28 : vector<1x128xf32> to vector<8x128xf32>
      %30 = arith.subf %27, %29 : vector<8x128xf32>
      %31 = arith.mulf %30, %30 : vector<8x128xf32>
      %cst_19 = arith.constant dense<0.000000e+00> : vector<8xf32>
      %32 = vector.multi_reduction <add>, %31, %cst_19 [1] : vector<8x128xf32> to vector<8xf32>
      %33 = vector.shape_cast %32 : vector<8xf32> to vector<8x1xf32>
      %34 = math.rsqrt %33 : vector<8x1xf32>
      %35 = vector.broadcast %34 : vector<8x1xf32> to vector<8x128xf32>
      %36 = arith.mulf %30, %35 : vector<8x128xf32>
      %c0_20 = arith.constant 0 : index
      %c0_21 = arith.constant 0 : index
      %37 = vector.load %arg4[%c0_20, %c0_21] : memref<8x128xf32, #tpu.memory_space<vmem>>, vector<8x128xf32>
      %38 = arith.mulf %26, %37 : vector<8x128xf32>
      %cst_22 = arith.constant dense<0.000000e+00> : vector<8xf32>
      %39 = vector.multi_reduction <add>, %38, %cst_22 [1] : vector<8x128xf32> to vector<8xf32>
      %40 = vector.shape_cast %39 : vector<8xf32> to vector<8x1xf32>
      %cst_23 = arith.constant dense<0.000000e+00> : vector<8x8xf32>
      %41 = tpu.matmul %26, %36, %cst_23 {dimension_numbers = #tpu.dot_dimension_numbers<[1], [1], [0], [0], [0, 0, 1, 0], [], []>} : vector<8x128xf32>, vector<8x128xf32>, vector<8x8xf32> -> vector<8x8xf32>
      %cst_24 = arith.constant 1.000000e+01 : f32
      %42 = vector.broadcast %cst_24 : f32 to vector<8x1xf32>
      %43 = arith.mulf %40, %42 : vector<8x1xf32>
      %cst_25 = arith.constant 1.000000e+01 : f32
      %44 = vector.broadcast %cst_25 : f32 to vector<8x8xf32>
      %45 = arith.mulf %41, %44 : vector<8x8xf32>
      %46 = tpu.iota {dimensions = array<i32: 1>} : vector<8x8xi32>
      %c8_i32 = arith.constant 8 : i32
      %47 = vector.broadcast %c8_i32 : i32 to vector<8x8xi32>
      %48 = arith.cmpi slt, %46, %47 : vector<8x8xi32>
      %cst_26 = arith.constant 0xFF800000 : f32
      %49 = vector.broadcast %cst_26 : f32 to vector<8x8xf32>
      %50 = arith.select %48, %45, %49 : vector<8x8xi1>, vector<8x8xf32>
      %cst_27 = arith.constant dense<0xFF800000> : vector<8xf32>
      %51 = vector.multi_reduction <maximumf>, %50, %cst_27 [1] : vector<8x8xf32> to vector<8xf32>
      %52 = vector.shape_cast %51 : vector<8xf32> to vector<8x1xf32>
      %53 = arith.maximumf %43, %52 : vector<8x1xf32>
      %54 = arith.subf %43, %53 : vector<8x1xf32>
      %55 = math.exp %54 : vector<8x1xf32>
      %56 = vector.broadcast %53 : vector<8x1xf32> to vector<8x8xf32>
      %57 = arith.subf %50, %56 : vector<8x8xf32>
      %58 = math.exp %57 : vector<8x8xf32>
      %cst_28 = arith.constant dense<0.000000e+00> : vector<8xf32>
      %59 = vector.multi_reduction <add>, %58, %cst_28 [1] : vector<8x8xf32> to vector<8xf32>
      %60 = vector.shape_cast %59 : vector<8xf32> to vector<8x1xf32>
      %61 = arith.addf %55, %60 : vector<8x1xf32>
      %62 = math.log %61 : vector<8x1xf32>
      %63 = arith.addf %53, %62 : vector<8x1xf32>
      %64 = arith.subf %63, %43 : vector<8x1xf32>
      %65 = tpu.iota {dimensions = array<i32: 0>} : vector<8x1xi32>
      %c2_i32_29 = arith.constant 2 : i32
      %66 = vector.broadcast %c2_i32_29 : i32 to vector<8x1xi32>
      %67 = arith.cmpi slt, %65, %66 : vector<8x1xi32>
      %cst_30 = arith.constant 0.000000e+00 : f32
      %68 = vector.broadcast %cst_30 : f32 to vector<8x1xf32>
      %69 = arith.select %67, %64, %68 : vector<8x1xi1>, vector<8x1xf32>
      %70 = vector.shape_cast %69 : vector<8x1xf32> to vector<1x8x1xf32>
      %cst_31 = arith.constant dense<0.000000e+00> : vector<1xf32>
      %71 = vector.multi_reduction <add>, %70, %cst_31 [1, 2] : vector<1x8x1xf32> to vector<1xf32>
      %72 = vector.shape_cast %71 : vector<1xf32> to vector<1x1x1xf32>
      %73 = vector.extract %72[0, 0, 0] : f32 from vector<1x1x1xf32>
      %cst_32 = arith.constant 2.000000e+00 : f32
      %74 = arith.divf %73, %cst_32 : f32
      %c0_33 = arith.constant 0 : index
      %c0_34 = arith.constant 0 : index
      %75 = memref.load %arg6[%c0_33, %c0_34] : memref<1x1xf32, #tpu.memory_space<smem>>
      memref.store %74, %arg6[%c0_33, %c0_34] : memref<1x1xf32, #tpu.memory_space<smem>>
    } else {
    }
    return
  }
  func.func @transform_0(%arg0: i32) -> (i32, i32) {
    %c0_i32 = arith.constant 0 : i32
    %c0_i32_0 = arith.constant 0 : i32
    return %c0_i32, %arg0 : i32, i32
  }
  func.func @transform_1(%arg0: i32) -> (i32, i32) {
    %c0_i32 = arith.constant 0 : i32
    %c0_i32_0 = arith.constant 0 : i32
    return %arg0, %c0_i32 : i32, i32
  }
  func.func @transform_2(%arg0: i32) -> (i32, i32) {
    %c0_i32 = arith.constant 0 : i32
    %c0_i32_0 = arith.constant 0 : i32
    %c0_i32_1 = arith.constant 0 : i32
    return %c0_i32, %c0_i32_0 : i32, i32
  }
  func.func @transform_3(%arg0: i32) -> (i32, i32) {
    %c0_i32 = arith.constant 0 : i32
    %c0_i32_0 = arith.constant 0 : i32
    %c0_i32_1 = arith.constant 0 : i32
    return %c0_i32, %c0_i32_0 : i32, i32
  }
  func.func @transform_4(%arg0: i32) -> (i32, i32) {
    %c0_i32 = arith.constant 0 : i32
    %c0_i32_0 = arith.constant 0 : i32
    %c0_i32_1 = arith.constant 0 : i32
    return %c0_i32, %c0_i32_0 : i32, i32
  }
  func.func @transform_5(%arg0: i32) -> (i32, i32) {
    %c0_i32 = arith.constant 0 : i32
    %c0_i32_0 = arith.constant 0 : i32
    %c0_i32_1 = arith.constant 0 : i32
    return %c0_i32, %c0_i32_0 : i32, i32
  }
}

</mosaic_0001>

<llo_original>
// kernel: tpu_custom_call.1
$region0: #{tpu_custom_call.1}
  #allocation0 [shape = 'u32[]', space=smem, size = 0x4, offset = 0x4, fixed_abs, tag = 'smem constant byte address 0x4 - core index']
  #allocation1 [shape = 'u32[144,128]{1,0:T(1,128)}', space=vmem, size = 0x12000, scoped, tag = 'internal scratch']
  #allocation2 [shape = 'f32[8,128]{1,0:T(8,128)}', space=vmem, size = 0x1000, scoped, tag = 'scratch operand']
  %s0 = inlined_call_operand.hbm [shape: bf16[8,768], index: 0, kind: input, shape index: {}]
  %s1 = inlined_call_operand.hbm [shape: bf16[768,128], index: 1, kind: input, shape index: {}]
  %s2 = inlined_call_operand.hbm [shape: f32[8,128], index: 2, kind: input, shape index: {}]
  %s3 = inlined_call_operand.vmem [shape: f32[8,128], index: 3, kind: input, shape index: {}]
  %s4 = inlined_call_operand.hbm [shape: f32[8,128], index: 4, kind: input, shape index: {}]
  %s5 = inlined_call_operand.hbm [shape: f32[1,1], index: 5, kind: output, shape index: {}]
  %s6 = sld [smem:[#allocation0]]
  $region77: #{tpu_custom_call.1} parent=0
    _
  %s8 = ssub.s32 1, %s6
  %s9 = scalar_select 0, %s8, %s6
  $region1: #{tpu_custom_call.1} parent=0
    #allocation3 [shape = 'u8[8192]{0}', space=vmem, size = 0x2000, scoped, tag = 'input window, operand 0']
    #allocation4 [shape = 's32[2]{0}', space=sflag, size = 0x8, scoped, tag = 'scoped memory for tpu_custom_call.1']
    #allocation5 [shape = 's32[2]{0}', space=sflag, size = 0x8, scoped, tag = 'scoped memory for tpu_custom_call.1']
    #allocation6 [shape = 'u8[131072]{0}', space=vmem, size = 0x20000, scoped, tag = 'input window, operand 1']
    #allocation7 [shape = 's32[2]{0}', space=sflag, size = 0x8, scoped, tag = 'scoped memory for tpu_custom_call.1']
    #allocation8 [shape = 'u8[4096]{0}', space=vmem, size = 0x1000, scoped, tag = 'input window, operand 2, single buffered']
    #allocation9 [shape = 'u8[4096]{0}', space=vmem, size = 0x1000, scoped, tag = 'input window, operand 4, single buffered']
    #allocation10 [shape = 's32[1]{0}', space=sflag, size = 0x4, scoped, tag = 'scoped memory for tpu_custom_call.1']
    #allocation11 [shape = 'u8[512]{0}', space=smem, size = 0x200, scoped, tag = 'output window, operand 0, single buffered']
    %10 = vsyncpa [#allocation4], 0
    %s11 = scalar_lea.sflag [#allocation4], 1
    %12 = vsyncpa %s11, 0
    %13 = vsyncpa [#allocation7], 0
    %s14 = scalar_lea.sflag [#allocation7], 1
    %15 = vsyncpa %s14, 0
    %16 = vsyncpa [#allocation10], 0
    %17 = vsyncpa [#allocation5], 0
    loop: start=0, step=1, limit=5
    $region2: #{tpu_custom_call.1} parent=1 // loop_pre_header
      _
    $region3: #{tpu_custom_call.1} parent=1 // loop_header
      %s19 = sphi 0, %s23
      %p20 = scmp.ge.s32.totalorder %s19, 5
      %s29 = sphi 0, %s31
      %s32 = sphi 0, %s29
      %s33 = sphi 0, %s32
      %s49 = sphi 0, %s33
      %s55 = sphi 0, %s57
      %s58 = sphi 0, %s55
      %s59 = sphi 0, %s58
      %s75 = sphi 0, %s59
      %s79 = sphi 0, %s79
      %s81 = sphi 0, %s79
      %s82 = sphi 0, %s81
      %s96 = sphi 0, %s82
      %s100 = sphi 0, %s100
      %s102 = sphi 0, %s100
      %s103 = sphi 0, %s102
      %s117 = sphi 0, %s103
      %s121 = sphi 0, %s121
      %s123 = sphi 0, %s121
      %s124 = sphi 0, %s123
      %s138 = sphi 0, %s124
      %s142 = sphi 0, %s142
      %s144 = sphi 0, %s142
      %s145 = sphi 0, %s144
      %s159 = sphi 0, %s145
    $region4: #{tpu_custom_call.1} parent=1 // loop_header_branch
      %22 = sbr.rel (%p20) target = $region8
    $region5: #{tpu_custom_call.1} parent=1 // loop_body
      %s24 = ssub.s32 %s19, 1
      %s25 = ssub.s32 %s19, 2
      %s26 = sadd.s32 %s19, 1
      %s27 = ssub.s32 %s19, %s26
      %p28 = scmp.eq.s32.totalorder %s27, 0
      %s30 = sadd.s32 %s29, 1
      %s31 = scalar_select %p28, %s29, %s30
      %p34 = pneg %p28
      %p35 = scmp.eq.s32.totalorder %s19, 2
      %p36 = por %p34, %p35
      %p37 = scmp.ne.s32.totalorder %s29, %s32
      %p38 = scmp.eq.s32.totalorder %s19, 0
      %p39 = por %p37, %p38
      %p40 = scmp.ne.s32.totalorder %s29, %s32
      %p41 = scmp.eq.s32.totalorder %s24, 2
      %p42 = por %p40, %p41
      %p43 = scmp.ne.s32.totalorder %s32, %s33
      %p44 = scmp.eq.s32.totalorder %s24, 0
      %p45 = por %p43, %p44
      %p46 = scmp.ne.s32.totalorder %s32, %s33
      %p47 = scmp.eq.s32.totalorder %s25, 2
      %p48 = por %p46, %p47
      %p50 = scmp.ne.s32.totalorder %s33, %s49
      %p51 = scmp.eq.s32.totalorder %s25, 0
      %p52 = por %p50, %p51
      %s53 = ssub.s32 %s19, %s26
      %p54 = scmp.eq.s32.totalorder %s53, 0
      %s56 = sadd.s32 %s55, 1
      %s57 = scalar_select %p54, %s55, %s56
      %p60 = pneg %p54
      %p61 = scmp.eq.s32.totalorder %s19, 2
      %p62 = por %p60, %p61
      %p63 = scmp.ne.s32.totalorder %s55, %s58
      %p64 = scmp.eq.s32.totalorder %s19, 0
      %p65 = por %p63, %p64
      %p66 = scmp.ne.s32.totalorder %s55, %s58
      %p67 = scmp.eq.s32.totalorder %s24, 2
      %p68 = por %p66, %p67
      %p69 = scmp.ne.s32.totalorder %s58, %s59
      %p70 = scmp.eq.s32.totalorder %s24, 0
      %p71 = por %p69, %p70
      %p72 = scmp.ne.s32.totalorder %s58, %s59
      %p73 = scmp.eq.s32.totalorder %s25, 2
      %p74 = por %p72, %p73
      %p76 = scmp.ne.s32.totalorder %s59, %s75
      %p77 = scmp.eq.s32.totalorder %s25, 0
      %p78 = por %p76, %p77
      %s80 = sadd.s32 %s79, 1
      %p83 = scmp.eq.s32.totalorder %s19, 2
      %p84 = scmp.ne.s32.totalorder %s79, %s81
      %p85 = scmp.eq.s32.totalorder %s19, 0
      %p86 = por %p84, %p85
      %p87 = scmp.ne.s32.totalorder %s79, %s81
      %p88 = scmp.eq.s32.totalorder %s24, 2
      %p89 = por %p87, %p88
      %p90 = scmp.ne.s32.totalorder %s81, %s82
      %p91 = scmp.eq.s32.totalorder %s24, 0
      %p92 = por %p90, %p91
      %p93 = scmp.ne.s32.totalorder %s81, %s82
      %p94 = scmp.eq.s32.totalorder %s25, 2
      %p95 = por %p93, %p94
      %p97 = scmp.ne.s32.totalorder %s82, %s96
      %p98 = scmp.eq.s32.totalorder %s25, 0
      %p99 = por %p97, %p98
      %s101 = sadd.s32 %s100, 1
      %p104 = scmp.eq.s32.totalorder %s19, 2
      %p105 = scmp.ne.s32.totalorder %s100, %s102
      %p106 = scmp.eq.s32.totalorder %s19, 0
      %p107 = por %p105, %p106
      %p108 = scmp.ne.s32.totalorder %s100, %s102
      %p109 = scmp.eq.s32.totalorder %s24, 2
      %p110 = por %p108, %p109
      %p111 = scmp.ne.s32.totalorder %s102, %s103
      %p112 = scmp.eq.s32.totalorder %s24, 0
      %p113 = por %p111, %p112
      %p114 = scmp.ne.s32.totalorder %s102, %s103
      %p115 = scmp.eq.s32.totalorder %s25, 2
      %p116 = por %p114, %p115
      %p118 = scmp.ne.s32.totalorder %s103, %s117
      %p119 = scmp.eq.s32.totalorder %s25, 0
      %p120 = por %p118, %p119
      %s122 = sadd.s32 %s121, 1
      %p125 = scmp.eq.s32.totalorder %s19, 2
      %p126 = scmp.ne.s32.totalorder %s121, %s123
      %p127 = scmp.eq.s32.totalorder %s19, 0
      %p128 = por %p126, %p127
      %p129 = scmp.ne.s32.totalorder %s121, %s123
      %p130 = scmp.eq.s32.totalorder %s24, 2
      %p131 = por %p129, %p130
      %p132 = scmp.ne.s32.totalorder %s123, %s124
      %p133 = scmp.eq.s32.totalorder %s24, 0
      %p134 = por %p132, %p133
      %p135 = scmp.ne.s32.totalorder %s123, %s124
      %p136 = scmp.eq.s32.totalorder %s25, 2
      %p137 = por %p135, %p136
      %p139 = scmp.ne.s32.totalorder %s124, %s138
      %p140 = scmp.eq.s32.totalorder %s25, 0
      %p141 = por %p139, %p140
      %s143 = sadd.s32 %s142, 1
      %p146 = scmp.eq.s32.totalorder %s19, 2
      %p147 = scmp.ne.s32.totalorder %s142, %s144
      %p148 = scmp.eq.s32.totalorder %s19, 0
      %p149 = por %p147, %p148
      %p150 = scmp.ne.s32.totalorder %s142, %s144
      %p151 = scmp.eq.s32.totalorder %s24, 2
      %p152 = por %p150, %p151
      %p153 = scmp.ne.s32.totalorder %s144, %s145
      %p154 = scmp.eq.s32.totalorder %s24, 0
      %p155 = por %p153, %p154
      %p156 = scmp.ne.s32.totalorder %s144, %s145
      %p157 = scmp.eq.s32.totalorder %s25, 2
      %p158 = por %p156, %p157
      %p160 = scmp.ne.s32.totalorder %s145, %s159
      %p161 = scmp.eq.s32.totalorder %s25, 0
      %p162 = por %p160, %p161
      %p163 = scmp.le.s32.totalorder 1, %s19
      %p164 = scmp.lt.s32.totalorder %s19, 4
      %p165 = pnand %p163, %p164
      %p166 = pneg %p165
      // Predicated region
      $region9: #{tpu_custom_call.1} parent=5 // pred_check
        _
      $region10: #{tpu_custom_call.1} parent=5 // pred_check_branch
        %168 = sbr.rel (%p165) target = $region12
      $region11: #{tpu_custom_call.1} parent=5 // pred_region
        %s169 = ssub.s32 %s19, 1
        // Predicated region
        $region13: #{tpu_custom_call.1} parent=11 // pred_check
          %p170 = pneg %p92
        $region14: #{tpu_custom_call.1} parent=11 // pred_check_branch
          %172 = sbr.rel (%p170) target = $region16
        $region15: #{tpu_custom_call.1} parent=11 // pred_region
          %s174 = ssub.s32 128, 128
          %175 = vsyncadd [#allocation7], %s174
          %s177 = sshll.u32 [#allocation8], 4
          %s178 = int_to_ptr.vmem [resolvable:$true] %s177
          %180 = dma.hbm_to_vmem [thread:$0]  %s2, 128, %s178, [#allocation7]
        $region16: #{tpu_custom_call.1} parent=11 // pred_fallthru
          _
        // Predicated region
        $region17: #{tpu_custom_call.1} parent=11 // pred_check
          %p181 = pneg %p113
        $region18: #{tpu_custom_call.1} parent=11 // pred_check_branch
          %183 = sbr.rel (%p181) target = $region20
        $region19: #{tpu_custom_call.1} parent=11 // pred_region
          _
        $region20: #{tpu_custom_call.1} parent=11 // pred_fallthru
          _
        // Predicated region
        $region21: #{tpu_custom_call.1} parent=11 // pred_check
          %p184 = pneg %p134
        $region22: #{tpu_custom_call.1} parent=11 // pred_check_branch
          %186 = sbr.rel (%p184) target = $region24
        $region23: #{tpu_custom_call.1} parent=11 // pred_region
          %s188 = ssub.s32 128, 128
          %189 = vsyncadd [#allocation10], %s188
          %s191 = sshll.u32 [#allocation9], 4
          %s192 = int_to_ptr.vmem [resolvable:$true] %s191
          %194 = dma.hbm_to_vmem [thread:$0]  %s4, 128, %s192, [#allocation10]
        $region24: #{tpu_custom_call.1} parent=11 // pred_fallthru
          _
      $region12: #{tpu_custom_call.1} parent=5 // pred_fallthru
        _
      %p195 = scmp.lt.s32.totalorder %s19, 3
      // Predicated region
      $region25: #{tpu_custom_call.1} parent=5 // pred_check
        %p196 = pneg %p195
      $region26: #{tpu_custom_call.1} parent=5 // pred_check_branch
        %198 = sbr.rel (%p196) target = $region28
      $region27: #{tpu_custom_call.1} parent=5 // pred_region
        // Predicated region
        $region29: #{tpu_custom_call.1} parent=27 // pred_check
          %p199 = pneg %p39
        $region30: #{tpu_custom_call.1} parent=27 // pred_check_branch
          %201 = sbr.rel (%p199) target = $region32
        $region31: #{tpu_custom_call.1} parent=27 // pred_region
          %s202 = sand.u32 %s29, 1
          %s203 = scalar_lea.sflag [#allocation4], %s202
          %s204 = sand.u32 %s29, 1
          %s205 = smul.addr %s204, 8
          %s206 = scalar_lea.vmem [#allocation3], %s205
          %s207 = smul.u32 2, %s19
          %s209 = ssub.s32 128, 128
          %210 = vsyncadd %s203, %s209
          %s211 = smul.addr %s207, 64
          %s212 = scalar_lea.hbm %s0, %s211
          %s214 = sshll.u32 %s206, 4
          %s215 = int_to_ptr.vmem [resolvable:$true] %s214
          %217 = dma.hbm_to_vmem [thread:$0]  %s212, 128, %s215, %s203
        $region32: #{tpu_custom_call.1} parent=27 // pred_fallthru
          _
        // Predicated region
        $region33: #{tpu_custom_call.1} parent=27 // pred_check
          %p218 = pneg %p65
        $region34: #{tpu_custom_call.1} parent=27 // pred_check_branch
          %220 = sbr.rel (%p218) target = $region36
        $region35: #{tpu_custom_call.1} parent=27 // pred_region
          %s221 = sand.u32 %s19, 1
          %s222 = scalar_lea.sflag [#allocation7], %s221
          %s223 = sand.u32 %s55, 1
          %s224 = smul.addr %s223, 128
          %s225 = scalar_lea.vmem [#allocation6], %s224
          %s226 = smul.u32 32, %s19
          %s228 = ssub.s32 2048, 2048
          %229 = vsyncadd %s222, %s228
          %s230 = smul.addr %s226, 64
          %s231 = scalar_lea.hbm %s1, %s230
          %s232 = sshll.u32 %s225, 4
          %s233 = int_to_ptr.vmem [resolvable:$true] %s232
          %238 = dma.hbm_to_vmem [thread:$0]  %s231, 2048, %s233, %s222, 64, 64, 4
        $region36: #{tpu_custom_call.1} parent=27 // pred_fallthru
          _
      $region28: #{tpu_custom_call.1} parent=5 // pred_fallthru
        _
      %p239 = scmp.le.s32.totalorder 1, %s19
      %p240 = scmp.lt.s32.totalorder %s19, 4
      %p241 = pnand %p239, %p240
      %p242 = pneg %p241
      // Predicated region
      $region37: #{tpu_custom_call.1} parent=5 // pred_check
        _
      $region38: #{tpu_custom_call.1} parent=5 // pred_check_branch
        %244 = sbr.rel (%p241) target = $region40
      $region39: #{tpu_custom_call.1} parent=5 // pred_region
        %s245 = ssub.s32 %s19, 1
        %s246 = sand.u32 %s32, 1
        %s247 = scalar_lea.sflag [#allocation4], %s246
        %s248 = sand.u32 %s32, 1
        %s249 = smul.addr %s248, 8
        %s250 = scalar_lea.vmem [#allocation3], %s249
        // Predicated region
        $region41: #{tpu_custom_call.1} parent=39 // pred_check
          %p251 = pneg %p45
        $region42: #{tpu_custom_call.1} parent=39 // pred_check_branch
          %253 = sbr.rel (%p251) target = $region44
        $region43: #{tpu_custom_call.1} parent=39 // pred_region
          %254 = dma.done %s247, 128
        $region44: #{tpu_custom_call.1} parent=39 // pred_fallthru
          _
        %s255 = sand.u32 %s24, 1
        %s256 = scalar_lea.sflag [#allocation7], %s255
        %s257 = sand.u32 %s58, 1
        %s258 = smul.addr %s257, 128
        %s259 = scalar_lea.vmem [#allocation6], %s258
        // Predicated region
        $region45: #{tpu_custom_call.1} parent=39 // pred_check
          %p260 = pneg %p71
        $region46: #{tpu_custom_call.1} parent=39 // pred_check_branch
          %262 = sbr.rel (%p260) target = $region48
        $region47: #{tpu_custom_call.1} parent=39 // pred_region
          %263 = dma.done %s256, 2048
        $region48: #{tpu_custom_call.1} parent=39 // pred_fallthru
          _
        // Predicated region
        $region49: #{tpu_custom_call.1} parent=39 // pred_check
          %p264 = pneg %p92
        $region50: #{tpu_custom_call.1} parent=39 // pred_check_branch
          %266 = sbr.rel (%p264) target = $region52
        $region51: #{tpu_custom_call.1} parent=39 // pred_region
          %267 = dma.done [#allocation7], 128
        $region52: #{tpu_custom_call.1} parent=39 // pred_fallthru
          _
        // Predicated region
        $region53: #{tpu_custom_call.1} parent=39 // pred_check
          %p268 = pneg %p134
        $region54: #{tpu_custom_call.1} parent=39 // pred_check_branch
          %270 = sbr.rel (%p268) target = $region56
        $region55: #{tpu_custom_call.1} parent=39 // pred_region
          %271 = dma.done [#allocation10], 128
        $region56: #{tpu_custom_call.1} parent=39 // pred_fallthru
          _
        %s272 = sand.u32 %s32, 1
        %s273 = scalar_lea.sflag [#allocation4], %s272
        %s274 = sand.u32 %s32, 1
        %s275 = smul.addr %s274, 8
        %s276 = scalar_lea.vmem [#allocation3], %s275
        %p277 = pneg %p45
        %p278 = pneg %p42
        %s279 = sand.u32 %s24, 1
        %s280 = scalar_lea.sflag [#allocation7], %s279
        %s281 = sand.u32 %s58, 1
        %s282 = smul.addr %s281, 128
        %s283 = scalar_lea.vmem [#allocation6], %s282
        %p284 = pneg %p71
        %p285 = pneg %p68
        %p286 = pneg %p92
        %p287 = pneg %p89
        %p288 = pneg %p113
        %p289 = pneg %p110
        %p290 = pneg %p134
        %p291 = pneg %p131
        %p292 = pneg %p155
        %p293 = pneg %p152
        %s294 = smul.u32 2, %s24
        %s295 = smul.u32 32, %s24
        %p297 = scmp.eq.s32.totalorder %s24, 0
        // Predicated region
        $region57: #{tpu_custom_call.1} parent=39 // pred_check
          %p298 = pneg %p297
        $region58: #{tpu_custom_call.1} parent=39 // pred_check_branch
          %300 = sbr.rel (%p298) target = $region60
        $region59: #{tpu_custom_call.1} parent=39 // pred_region
          %301 = vst [vmem:[#allocation2] sm:$0xff] 0.0
        $region60: #{tpu_custom_call.1} parent=39 // pred_fallthru
          _
        %v302 = vld [vmem:[#allocation2] sm:$0xff]
        %v303 = vld [vmem:[%s250] sm:$0xff]
        %v304 = vld [vmem:[%s259] sm:$0xf]
        %v305 = vld [vmem:[%s259 + $0x4] sm:$0xf]
        %v306 = vld [vmem:[%s259 + $0x8] sm:$0xf]
        %v307 = vld [vmem:[%s259 + $0xc] sm:$0xf]
        %v308 = vld [vmem:[%s259 + $0x10] sm:$0xf]
        %v309 = vld [vmem:[%s259 + $0x14] sm:$0xf]
        %v310 = vld [vmem:[%s259 + $0x18] sm:$0xf]
        %v311 = vld [vmem:[%s259 + $0x1c] sm:$0xf]
        %v312 = vld [vmem:[%s259 + $0x20] sm:$0xf]
        %v313 = vld [vmem:[%s259 + $0x24] sm:$0xf]
        %v314 = vld [vmem:[%s259 + $0x28] sm:$0xf]
        %v315 = vld [vmem:[%s259 + $0x2c] sm:$0xf]
        %v316 = vld [vmem:[%s259 + $0x30] sm:$0xf]
        %v317 = vld [vmem:[%s259 + $0x34] sm:$0xf]
        %v318 = vld [vmem:[%s259 + $0x38] sm:$0xf]
        %v319 = vld [vmem:[%s259 + $0x3c] sm:$0xf]
        %v320 = vld [vmem:[%s259 + $0x40] sm:$0xf]
        %v321 = vld [vmem:[%s259 + $0x44] sm:$0xf]
        %v322 = vld [vmem:[%s259 + $0x48] sm:$0xf]
        %v323 = vld [vmem:[%s259 + $0x4c] sm:$0xf]
        %v324 = vld [vmem:[%s259 + $0x50] sm:$0xf]
        %v325 = vld [vmem:[%s259 + $0x54] sm:$0xf]
        %v326 = vld [vmem:[%s259 + $0x58] sm:$0xf]
        %v327 = vld [vmem:[%s259 + $0x5c] sm:$0xf]
        %v328 = vld [vmem:[%s259 + $0x60] sm:$0xf]
        %v329 = vld [vmem:[%s259 + $0x64] sm:$0xf]
        %v330 = vld [vmem:[%s259 + $0x68] sm:$0xf]
        %v331 = vld [vmem:[%s259 + $0x6c] sm:$0xf]
        %v332 = vld [vmem:[%s259 + $0x70] sm:$0xf]
        %v333 = vld [vmem:[%s259 + $0x74] sm:$0xf]
        %v334 = vld [vmem:[%s259 + $0x78] sm:$0xf]
        %v335 = vld [vmem:[%s259 + $0x7c] sm:$0xf]
        %v337 = vunpack.c.l.b16 %v303
        %v338 = vunpack.c.h.b16 %v303
        %v339 = vpack.c.b16 %v337, %v337
        %v340 = vpack.c.b16 %v338, %v338
        %v375 = vunpack.c.l.b16 %v304
        %v376 = vunpack.c.l.b16 %v305
        %v377 = vunpack.c.l.b16 %v306
        %v378 = vunpack.c.l.b16 %v307
        %v379 = vunpack.c.l.b16 %v308
        %v380 = vunpack.c.l.b16 %v309
        %v381 = vunpack.c.l.b16 %v310
        %v382 = vunpack.c.l.b16 %v311
        %v383 = vunpack.c.l.b16 %v312
        %v384 = vunpack.c.l.b16 %v313
        %v385 = vunpack.c.l.b16 %v314
        %v386 = vunpack.c.l.b16 %v315
        %v387 = vunpack.c.l.b16 %v316
        %v388 = vunpack.c.l.b16 %v317
        %v389 = vunpack.c.l.b16 %v318
        %v390 = vunpack.c.l.b16 %v319
        %v391 = vunpack.c.l.b16 %v320
        %v392 = vunpack.c.l.b16 %v321
        %v393 = vunpack.c.l.b16 %v322
        %v394 = vunpack.c.l.b16 %v323
        %v395 = vunpack.c.l.b16 %v324
        %v396 = vunpack.c.l.b16 %v325
        %v397 = vunpack.c.l.b16 %v326
        %v398 = vunpack.c.l.b16 %v327
        %v399 = vunpack.c.l.b16 %v328
        %v400 = vunpack.c.l.b16 %v329
        %v401 = vunpack.c.l.b16 %v330
        %v402 = vunpack.c.l.b16 %v331
        %v403 = vunpack.c.l.b16 %v332
        %v404 = vunpack.c.l.b16 %v333
        %v405 = vunpack.c.l.b16 %v334
        %v406 = vunpack.c.l.b16 %v335
        %v407 = vpack.c.b16 %v376, %v375
        %v408 = vpack.c.b16 %v378, %v377
        %v409 = vpack.c.b16 %v380, %v379
        %v410 = vpack.c.b16 %v382, %v381
        %v411 = vpack.c.b16 %v384, %v383
        %v412 = vpack.c.b16 %v386, %v385
        %v413 = vpack.c.b16 %v388, %v387
        %v414 = vpack.c.b16 %v390, %v389
        %v415 = vpack.c.b16 %v392, %v391
        %v416 = vpack.c.b16 %v394, %v393
        %v417 = vpack.c.b16 %v396, %v395
        %v418 = vpack.c.b16 %v398, %v397
        %v419 = vpack.c.b16 %v400, %v399
        %v420 = vpack.c.b16 %v402, %v401
        %v421 = vpack.c.b16 %v404, %v403
        %v422 = vpack.c.b16 %v406, %v405
        %439 = vmatprep.subr.bf16.mxu0 0
        %440 = vmatpush1.bf16.msra.mxu0 %v407
        %441 = vmatprep.subr.bf16.mxu0 0
        %442 = vmatpush1.bf16.msra.mxu0 %v408
        %443 = vmatprep.subr.bf16.mxu0 0
        %444 = vmatpush1.bf16.msra.mxu0 %v409
        %445 = vmatprep.subr.bf16.mxu0 0
        %446 = vmatpush1.bf16.msra.mxu0 %v410
        %447 = vmatprep.subr.bf16.mxu0 0
        %448 = vmatpush1.bf16.msra.mxu0 %v411
        %449 = vmatprep.subr.bf16.mxu0 0
        %450 = vmatpush1.bf16.msra.mxu0 %v412
        %451 = vmatprep.subr.bf16.mxu0 0
        %452 = vmatpush1.bf16.msra.mxu0 %v413
        %453 = vmatprep.subr.bf16.mxu0 0
        %454 = vmatpush1.bf16.msra.mxu0 %v414
        %455 = vmatprep.subr.bf16.mxu0 0
        %456 = vmatpush1.bf16.msra.mxu0 %v415
        %457 = vmatprep.subr.bf16.mxu0 0
        %458 = vmatpush1.bf16.msra.mxu0 %v416
        %459 = vmatprep.subr.bf16.mxu0 0
        %460 = vmatpush1.bf16.msra.mxu0 %v417
        %461 = vmatprep.subr.bf16.mxu0 0
        %462 = vmatpush1.bf16.msra.mxu0 %v418
        %463 = vmatprep.subr.bf16.mxu0 0
        %464 = vmatpush1.bf16.msra.mxu0 %v419
        %465 = vmatprep.subr.bf16.mxu0 0
        %466 = vmatpush1.bf16.msra.mxu0 %v420
        %467 = vmatprep.subr.bf16.mxu0 0
        %468 = vmatpush1.bf16.msra.mxu0 %v421
        %469 = vmatprep.subr.bf16.mxu0 0
        %470 = vmatpush1.bf16.msra.mxu0 %v422
        %471 = vmatprep.mubr.bf16.mxu0 %v340
        %472 = vmatmul.mubr.bf16.gmra.mrb[0].mxu0 %v339
        %v473 = vpop.f32.mrb[0].mxu0
        %v474 = vadd.f32 0.0, %v473
        %v475 = vpop.f32.mrb[0].mxu0
        %v476 = vpop.f32.mrb[0].mxu0
        %v477 = vpop.f32.mrb[0].mxu0
        %478 = vdwg.mxu0
        %v479 = vadd.f32 %v302, %v474
        %480 = vst [vmem:[#allocation2] sm:$0xff] %v479
        %p481 = scmp.eq.s32.totalorder %s24, 2
        // Predicated region
        $region61: #{tpu_custom_call.1} parent=39 // pred_check
          %p482 = pneg %p481
        $region62: #{tpu_custom_call.1} parent=39 // pred_check_branch
          %484 = sbr.rel (%p482) target = $region64
        $region63: #{tpu_custom_call.1} parent=39 // pred_region
          %v485 = vld [vmem:[#allocation2] sm:$0xff]
          %v486 = vmul.f32 %v485, %v485
          %487 = vadd.xlane.f32.xlu0 %v486
          %v488 = vpop.xlane.xlu0 %487
          %v489 = vrsqrt.pop %v488
          %v490 = vmul.f32 %v485, %v489
          %v491 = vld [vmem:[#allocation8] sm:$0xff]
          %v492 = vsub.f32 %v490, %v491
          %v493 = vmul.f32 %v492, %v492
          %494 = vadd.xlane.f32.xlu0 %v493
          %v495 = vpop.xlane.xlu0 %494
          %v496 = vrsqrt.pop %v495
          %v497 = vmul.f32 %v492, %v496
          %v498 = vld [vmem:[#allocation9] sm:$0xff]
          %v499 = vld [vmem:[#allocation8] sm:$0x1]
          %v500 = vlaneseq
          %v501 = vshrl.u32 %v500, 7
          %v502 = vsub.s32 0, %v501
          %v503 = vrot.slane %v499, %v502
          %v504 = vsub.f32 %v498, %v503
          %v505 = vmul.f32 %v504, %v504
          %506 = vadd.xlane.f32.xlu0 %v505
          %v507 = vpop.xlane.xlu0 %506
          %v508 = vrsqrt.pop %v507
          %v509 = vmul.f32 %v504, %v508
          %v510 = vld [vmem:[%s3] sm:$0xff]
          %v511 = vmul.f32 %v497, %v510
          %512 = vadd.xlane.f32.xlu0 %v511
          %v513 = vpop.xlane.xlu0 %512
          %514 = vmatprep.subr.mxu0 0.0
          %515 = vmatpush1.xpose.msra.mxu0 %v509
          %516 = vmatprep.subr.mxu0 0.0
          %517 = vmatpush1.xpose.msra.mxu0 0.0
          %518 = vmatprep.subr.mxu0 0.0
          %519 = vmatpush1.xpose.msra.mxu0 0.0
          %520 = vmatprep.subr.mxu0 0.0
          %521 = vmatpush1.xpose.msra.mxu0 0.0
          %522 = vmatprep.subr.mxu0 0.0
          %523 = vmatpush1.xpose.msra.mxu0 0.0
          %524 = vmatprep.subr.mxu0 0.0
          %525 = vmatpush1.xpose.msra.mxu0 0.0
          %526 = vmatprep.subr.mxu0 0.0
          %527 = vmatpush1.xpose.msra.mxu0 0.0
          %528 = vmatprep.subr.mxu0 0.0
          %529 = vmatpush1.xpose.msra.mxu0 0.0
          %530 = vmatprep.subr.mxu0 0.0
          %531 = vmatpush1.xpose.msra.mxu0 0.0
          %532 = vmatprep.subr.mxu0 0.0
          %533 = vmatpush1.xpose.msra.mxu0 0.0
          %534 = vmatprep.subr.mxu0 0.0
          %535 = vmatpush1.xpose.msra.mxu0 0.0
          %536 = vmatprep.subr.mxu0 0.0
          %537 = vmatpush1.xpose.msra.mxu0 0.0
          %538 = vmatprep.subr.mxu0 0.0
          %539 = vmatpush1.xpose.msra.mxu0 0.0
          %540 = vmatprep.subr.mxu0 0.0
          %541 = vmatpush1.xpose.msra.mxu0 0.0
          %542 = vmatprep.subr.mxu0 0.0
          %543 = vmatpush1.xpose.msra.mxu0 0.0
          %544 = vmatprep.subr.mxu0 0.0
          %545 = vmatpush1.xpose.msra.mxu0 0.0
          %546 = vmatprep.subr.mxu0 0.0
          %547 = vmatpush1.xpose.msra.mxu0 0.0
          %548 = vmatprep.subr.mxu0 0.0
          %549 = vmatpush1.xpose.msra.mxu0 0.0
          %550 = vmatprep.subr.mxu0 0.0
          %551 = vmatpush1.xpose.msra.mxu0 0.0
          %552 = vmatprep.subr.mxu0 0.0
          %553 = vmatpush1.xpose.msra.mxu0 0.0
          %554 = vmatprep.subr.mxu0 0.0
          %555 = vmatpush1.xpose.msra.mxu0 0.0
          %556 = vmatprep.subr.mxu0 0.0
          %557 = vmatpush1.xpose.msra.mxu0 0.0
          %558 = vmatprep.subr.mxu0 0.0
          %559 = vmatpush1.xpose.msra.mxu0 0.0
          %560 = vmatprep.subr.mxu0 0.0
          %561 = vmatpush1.xpose.msra.mxu0 0.0
          %562 = vmatprep.subr.mxu0 0.0
          %563 = vmatpush1.xpose.msra.mxu0 0.0
          %564 = vmatprep.subr.mxu0 0.0
          %565 = vmatpush1.xpose.msra.mxu0 0.0
          %566 = vmatprep.subr.mxu0 0.0
          %567 = vmatpush1.xpose.msra.mxu0 0.0
          %568 = vmatprep.subr.mxu0 0.0
          %569 = vmatpush1.xpose.msra.mxu0 0.0
          %570 = vmatprep.subr.mxu0 0.0
          %571 = vmatpush1.xpose.msra.mxu0 0.0
          %572 = vmatprep.subr.mxu0 0.0
          %573 = vmatpush1.xpose.msra.mxu0 0.0
          %574 = vmatprep.subr.mxu0 0.0
          %575 = vmatpush1.xpose.msra.mxu0 0.0
          %576 = vmatprep.subr.mxu0 0.0
          %577 = vmatpush1.xpose.msra.mxu0 0.0
          %578 = vmatprep.mubr.f32.mxu0 0.0
          %579 = vmatmul.mubr.f32.gmra.mrb[0].mxu0 %v497
          %v580 = vpop.f32.mrb[0].mxu0
          %v581 = vadd.f32 0.0, %v580
          %v582 = vpop.f32.mrb[0].mxu0
          %583 = vdwg.mxu0
          %v584 = vmul.f32 %v513, 10.0
          %v585 = vmul.f32 %v581, 10.0
          %v586 = vlaneseq
          %v587 = vand.u32 %v586, 127
          %vm588 = vcmp.lt.s32.totalorder %v587, 8
          %v589 = vsel %vm588, %v585, -inf
          %vm590 = vcmask 64512
          %v591 = vsel %vm590, %v589, -inf
          %592 = vmax.xlane.f32.xlu0 %v591
          %v593 = vpop.xlane.xlu0 %592
          %v594 = vmax.f32 %v584, %v593
          %v595 = vsub.f32 %v584, %v594
          %v596 = vmul.f32 %v595, 1.442695
          %v597 = vpow.pop %v596
          %v598 = vsub.f32 %v589, %v594
          %v599 = vmul.f32 %v598, 1.442695
          %v600 = vpow.pop %v599
          %v601 = vsel %vm590, %v600, 0.0
          %602 = vadd.xlane.f32.xlu0 %v601
          %v603 = vpop.xlane.xlu0 %602
          %v604 = vadd.f32 %v597, %v603
          %v605 = vlog2.pop %v604
          %v606 = vmul.f32 %v605, 0.6931472
          %v607 = vadd.f32 %v594, %v606
          %v608 = vsub.f32 %v607, %v584
          %v609 = vlaneseq
          %v610 = vshrl.u32 %v609, 7
          %vm611 = vcmp.lt.s32.totalorder %v610, 2
          %v612 = vsel %vm611, %v608, 0.0
          %vm613 = vcmask 7168
          %v614 = vsel %vm613, %v612, 0.0
          %615 = vadd.xlane.f32.xlu0 %v614
          %v616 = vpop.xlane.xlu0 %615
          %v617 = vrot.slane %v616, 4
          %v618 = vadd.f32 %v616, %v617
          %v619 = vrot.slane %v618, 2
          %v620 = vadd.f32 %v618, %v619
          %v621 = vrot.slane %v620, 1
          %v622 = vadd.f32 %v620, %v621
          %s623 = vtos %v622
          %v624 = vrcp.pop 2.0
          %s625 = vtos %v624
          %s626 = smul.f32 %s623, %s625
          %s627 = scalar_lea.smem [#allocation11], 0
          %628 = sst [smem:[%s627]] %s626
        $region64: #{tpu_custom_call.1} parent=39 // pred_fallthru
          _
        // Predicated region
        $region65: #{tpu_custom_call.1} parent=39 // pred_check
          %p629 = pneg %p152
        $region66: #{tpu_custom_call.1} parent=39 // pred_check_branch
          %631 = sbr.rel (%p629) target = $region68
        $region67: #{tpu_custom_call.1} parent=39 // pred_region
          %s633 = ssub.s32 16, 16
          %634 = vsyncadd [#allocation5], %s633
          %637 = dma.smem_to_hbm [#allocation11], 16, %s5, [#allocation5]
        $region68: #{tpu_custom_call.1} parent=39 // pred_fallthru
          _
        // Predicated region
        $region69: #{tpu_custom_call.1} parent=39 // pred_check
          %p638 = pneg %p152
        $region70: #{tpu_custom_call.1} parent=39 // pred_check_branch
          %640 = sbr.rel (%p638) target = $region72
        $region71: #{tpu_custom_call.1} parent=39 // pred_region
          %641 = dma.done [#allocation5], 16
        $region72: #{tpu_custom_call.1} parent=39 // pred_fallthru
          _
        %642 = sfence
      $region40: #{tpu_custom_call.1} parent=5 // pred_fallthru
        _
      %p643 = scmp.le.s32.totalorder 2, %s19
      // Predicated region
      $region73: #{tpu_custom_call.1} parent=5 // pred_check
        %p644 = pneg %p643
      $region74: #{tpu_custom_call.1} parent=5 // pred_check_branch
        %646 = sbr.rel (%p644) target = $region76
      $region75: #{tpu_custom_call.1} parent=5 // pred_region
        %s647 = ssub.s32 %s19, 2
      $region76: #{tpu_custom_call.1} parent=5 // pred_fallthru
        _
    $region6: #{tpu_custom_call.1} parent=1 // loop_footer
      %s23 = sadd.s32 1, %s19
    $region7: #{tpu_custom_call.1} parent=1 // loop_footer_branch
      %18 = sbr.rel target = $region3
    $region8: #{tpu_custom_call.1} parent=1 // loop_exit
      _
    %648 = vsyncpa [#allocation4], 1
    %s649 = scalar_lea.sflag [#allocation4], 1
    %650 = vsyncpa %s649, 1
    %651 = vsyncpa [#allocation7], 1
    %s652 = scalar_lea.sflag [#allocation7], 1
    %653 = vsyncpa %s652, 1
    %654 = vsyncpa [#allocation10], 1
    %655 = vsyncpa [#allocation5], 1
    %s656 = scalar_lea.sflag [#allocation5], 1
    %657 = vsyncpa %s656, 1

</llo_original>
